<compile_context>
chip_gen: v7x
topology: tpu7x:2x2x1
jax: 0.10.0
libtpu: 0.0.40
codegen_flags: <defaults>
</compile_context>

<pallas_src>
import functools

import jax
import jax.numpy as jnp
from jax.experimental import pallas as pl
from jax.experimental.pallas import tpu as pltpu


def _channel_attention_kernel(x_ref, w1_ref, b1_ref, w2_ref, b2_ref, o_ref,
                              *, hw, hw_pad, fuse_multiply):
    # x_ref: (TB, C, HW_pad)   w1_ref: (C, mid)  b1_ref: (1, mid)
    # w2_ref: (mid, C)         b2_ref: (1, C)    o_ref: (TB, C, HW_pad)
    x = x_ref[...].astype(jnp.float32)                      # (TB, C, HWp)
    tb = x.shape[0]

    if hw_pad != hw:
        # Padded tail (zeros from the wrapper) must not pollute the max; the
        # sum is unaffected by zero padding, and we divide by the true HW.
        col = jax.lax.broadcasted_iota(jnp.int32, x.shape, 2)
        x_for_max = jnp.where(col < hw, x, jnp.finfo(jnp.float32).min)
    else:
        x_for_max = x

    avg_pool = jnp.sum(x, axis=-1) * (1.0 / hw)             # (TB, C)
    max_pool = jnp.max(x_for_max, axis=-1)                  # (TB, C)

    # One shared-MLP pass over both pooled vectors (fills MXU sublanes instead
    # of two M=1 matmuls).
    pooled = jnp.concatenate([avg_pool, max_pool], axis=0)  # (2*TB, C)
    h = jnp.dot(pooled, w1_ref[...], preferred_element_type=jnp.float32) + b1_ref[...]
    h = jnp.maximum(h, 0.0)                                 # ReLU
    y = jnp.dot(h, w2_ref[...], preferred_element_type=jnp.float32) + b2_ref[...]

    sig = jax.nn.sigmoid(y[:tb] + y[tb:])                   # (TB, C)

    if fuse_multiply:
        # Optional fused CBAM usage: x is already resident in VMEM, so applying
        # the attention here halves end-to-end HBM traffic for the stage.
        o_ref[...] = (x * sig[:, :, None]).astype(o_ref.dtype)
    else:
        # Module semantics: spatially-repeated attention map.
        o_ref[...] = jnp.broadcast_to(sig[:, :, None], x.shape).astype(o_ref.dtype)


def _pick_batch_tile(B, C, hw_pad):
    """Largest divisor of B whose double-buffered in+out blocks fit a
    conservative VMEM budget, keeping >=2 grid steps when B >= 2 (v7x has
    2 TensorCores sharing a 'parallel' grid axis)."""
    budget = 8 * 1024 * 1024                       # conservative across v5e/v6e/v7x
    bytes_per_b = 2 * 2 * C * hw_pad * 4           # 2 bufs x (in + out) x f32
    cap = max(1, budget // bytes_per_b)
    if B >= 2:
        cap = min(cap, B // 2)
    tb = 1
    for cand in range(1, B + 1):
        if B % cand == 0 and cand <= cap:
            tb = cand
    return tb


def channel_attention(x, w1, b1, w2, b2, *, fuse_multiply=False, block_batch=None):
    """x: (B, C, H, W) float32.  Weights in torch nn.Linear convention:
       w1: (mid, C), b1: (mid,), w2: (C, mid), b2: (C,).

       fuse_multiply=False (default) matches the torch module and returns the
       broadcast attention map; fuse_multiply=True returns x * attention
       (the standard CBAM consumer fusion)."""
    B, C, H, W = x.shape
    HW = H * W
    HW_pad = ((HW + 127) // 128) * 128             # lane-dense output last dim
    mid = w1.shape[0]

    x_flat = x.reshape(B, C, HW)
    if HW_pad != HW:
        x_flat = jnp.pad(x_flat, ((0, 0), (0, 0), (0, HW_pad - HW)))

    w1_t = jnp.transpose(w1)                       # (C, mid)   y = v @ W.T + b
    w2_t = jnp.transpose(w2)                       # (mid, C)
    b1_2d = b1.reshape(1, mid)
    b2_2d = b2.reshape(1, C)

    TB = _pick_batch_tile(B, C, HW_pad) if block_batch is None else block_batch
    assert B % TB == 0

    kernel = functools.partial(_channel_attention_kernel,
                               hw=HW, hw_pad=HW_pad, fuse_multiply=fuse_multiply)

    out_flat = pl.pallas_call(
        kernel,
        out_shape=jax.ShapeDtypeStruct((B, C, HW_pad), x.dtype),
        grid=(B // TB,),
        in_specs=[
            pl.BlockSpec((TB, C, HW_pad), lambda b: (b, 0, 0)),
            pl.BlockSpec((C, mid), lambda b: (0, 0)),
            pl.BlockSpec((1, mid), lambda b: (0, 0)),
            pl.BlockSpec((mid, C), lambda b: (0, 0)),
            pl.BlockSpec((1, C), lambda b: (0, 0)),
        ],
        out_specs=pl.BlockSpec((TB, C, HW_pad), lambda b: (b, 0, 0)),
        compiler_params=pltpu.CompilerParams(
            dimension_semantics=("parallel",),
            vmem_limit_bytes=32 * 1024 * 1024,
        ),
    )(x_flat, w1_t, b1_2d, w2_t, b2_2d)

    if HW_pad != HW:
        out_flat = out_flat[:, :, :HW]
    return out_flat.reshape(B, C, H, W)


def channel_attention_ref(x, w1, b1, w2, b2):
    """Pure-JAX reference mirroring the torch forward."""
    B, C, H, W = x.shape
    avg_pool = jnp.mean(x, axis=(2, 3))
    max_pool = jnp.max(x, axis=(2, 3))

    def mlp(v):
        h = jnp.maximum(v @ w1.T + b1, 0.0)
        return h @ w2.T + b2

    sig = jax.nn.sigmoid(mlp(avg_pool) + mlp(max_pool))
    return jnp.broadcast_to(sig[:, :, None, None], (B, C, H, W))


if __name__ == "__main__":
    # Module config consistent with ChannelAttention(n_channels_in=4, reduction_ratio=2)
    B, C, H, W = 2, 4, 16, 16
    reduction_ratio = 2
    mid = int(C / float(reduction_ratio))   # 2

    key = jax.random.PRNGKey(0)
    kx, k1, k2, k3, k4 = jax.random.split(key, 5)

    x = jax.random.normal(kx, (B, C, H, W), dtype=jnp.float32)

    # torch nn.Linear shapes: weight (out, in), bias (out,)
    w1 = jax.random.normal(k1, (mid, C), dtype=jnp.float32) * 0.5
    b1 = jax.random.normal(k2, (mid,), dtype=jnp.float32) * 0.1
    w2 = jax.random.normal(k3, (C, mid), dtype=jnp.float32) * 0.5
    b2 = jax.random.normal(k4, (C,), dtype=jnp.float32) * 0.1

    # 1) Module-semantics path (broadcast attention map), HW already 128-aligned.
    out = jax.block_until_ready(channel_attention(x, w1, b1, w2, b2))
    ref = channel_attention_ref(x, w1, b1, w2, b2)
    assert out.shape == (B, C, H, W)
    assert jnp.allclose(out, ref, atol=1e-5, rtol=1e-5), "mismatch vs reference"

    # 2) Padded-HW path (non-multiple-of-128 spatial size) exercises the masked
    #    mean/max over the padded tail.
    x2 = jax.random.normal(kx, (B, C, 14, 14), dtype=jnp.float32)
    out2 = jax.block_until_ready(channel_attention(x2, w1, b1, w2, b2))
    ref2 = channel_attention_ref(x2, w1, b1, w2, b2)
    assert jnp.allclose(out2, ref2, atol=1e-5, rtol=1e-5), "mismatch (padded HW)"

    # 3) Fused x * attention variant (standard CBAM consumer fusion).
    out3 = jax.block_until_ready(
        channel_attention(x, w1, b1, w2, b2, fuse_multiply=True))
    assert jnp.allclose(out3, x * ref, atol=1e-5, rtol=1e-5), "mismatch (fused)"

    print("KERNEL_OK")
</pallas_src>

<mosaic_0001>
module attributes {stable_mosaic.version = 11 : i64} {
  func.func @_channel_attention_kernel(%arg0: i32, %arg1: memref<1x4x256xf32, #tpu.memory_space<vmem>>, %arg2: memref<4x2xf32, #tpu.memory_space<vmem>>, %arg3: memref<1x2xf32, #tpu.memory_space<vmem>>, %arg4: memref<2x4xf32, #tpu.memory_space<vmem>>, %arg5: memref<1x4xf32, #tpu.memory_space<vmem>>, %arg6: memref<1x4x256xf32, #tpu.memory_space<vmem>>) attributes {dimension_semantics = [#tpu.dimension_semantics<parallel>], iteration_bounds = array<i64: 2>, scalar_prefetch = 0 : i64, scratch_operands = 0 : i64, tpu.core_type = #tpu.core_type<tc>, window_params = [{transform_indices = @transform_0, window_bounds = array<i64: 1, 4, 256>}, {pipeline_mode = #tpu.pipeline_mode<synchronous>, transform_indices = @transform_1, window_bounds = array<i64: 4, 2>}, {pipeline_mode = #tpu.pipeline_mode<synchronous>, transform_indices = @transform_2, window_bounds = array<i64: 1, 2>}, {pipeline_mode = #tpu.pipeline_mode<synchronous>, transform_indices = @transform_3, window_bounds = array<i64: 2, 4>}, {pipeline_mode = #tpu.pipeline_mode<synchronous>, transform_indices = @transform_4, window_bounds = array<i64: 1, 4>}, {transform_indices = @transform_5, window_bounds = array<i64: 1, 4, 256>}]} {
    %c0 = arith.constant 0 : index
    %c0_0 = arith.constant 0 : index
    %c0_1 = arith.constant 0 : index
    %0 = vector.load %arg1[%c0, %c0_0, %c0_1] : memref<1x4x256xf32, #tpu.memory_space<vmem>>, vector<1x4x256xf32>
    %cst = arith.constant dense<0.000000e+00> : vector<1x4xf32>
    %1 = vector.multi_reduction <add>, %0, %cst [2] : vector<1x4x256xf32> to vector<1x4xf32>
    %cst_2 = arith.constant 3.906250e-03 : f32
    %2 = vector.broadcast %cst_2 : f32 to vector<1x4xf32>
    %3 = arith.mulf %1, %2 : vector<1x4xf32>
    %cst_3 = arith.constant dense<0xFF800000> : vector<1x4xf32>
    %4 = vector.multi_reduction <maximumf>, %0, %cst_3 [2] : vector<1x4x256xf32> to vector<1x4xf32>
    %5 = tpu.concatenate %3, %4 in 0 : vector<1x4xf32>, vector<1x4xf32> -> vector<2x4xf32>
    %c0_4 = arith.constant 0 : index
    %c0_5 = arith.constant 0 : index
    %6 = vector.load %arg2[%c0_4, %c0_5] : memref<4x2xf32, #tpu.memory_space<vmem>>, vector<4x2xf32>
    %cst_6 = arith.constant dense<0.000000e+00> : vector<2x2xf32>
    %7 = tpu.matmul %5, %6, %cst_6 {dimension_numbers = #tpu.dot_dimension_numbers<[1], [0], [0], [1], [0, 0, 1, 1], [], []>} : vector<2x4xf32>, vector<4x2xf32>, vector<2x2xf32> -> vector<2x2xf32>
    %c0_7 = arith.constant 0 : index
    %c0_8 = arith.constant 0 : index
    %8 = vector.load %arg3[%c0_7, %c0_8] : memref<1x2xf32, #tpu.memory_space<vmem>>, vector<1x2xf32>
    %9 = vector.broadcast %8 : vector<1x2xf32> to vector<2x2xf32>
    %10 = arith.addf %7, %9 : vector<2x2xf32>
    %cst_9 = arith.constant 0.000000e+00 : f32
    %11 = vector.broadcast %cst_9 : f32 to vector<2x2xf32>
    %12 = arith.maximumf %10, %11 : vector<2x2xf32>
    %c0_10 = arith.constant 0 : index
    %c0_11 = arith.constant 0 : index
    %13 = vector.load %arg4[%c0_10, %c0_11] : memref<2x4xf32, #tpu.memory_space<vmem>>, vector<2x4xf32>
    %cst_12 = arith.constant dense<0.000000e+00> : vector<2x4xf32>
    %14 = tpu.matmul %12, %13, %cst_12 {dimension_numbers = #tpu.dot_dimension_numbers<[1], [0], [0], [1], [0, 0, 1, 1], [], []>} : vector<2x2xf32>, vector<2x4xf32>, vector<2x4xf32> -> vector<2x4xf32>
    %c0_13 = arith.constant 0 : index
    %c0_14 = arith.constant 0 : index
    %15 = vector.load %arg5[%c0_13, %c0_14] : memref<1x4xf32, #tpu.memory_space<vmem>>, vector<1x4xf32>
    %16 = vector.broadcast %15 : vector<1x4xf32> to vector<2x4xf32>
    %17 = arith.addf %14, %16 : vector<2x4xf32>
    %18 = vector.extract_strided_slice %17 {offsets = [0, 0], sizes = [1, 4], strides = [1, 1]} : vector<2x4xf32> to vector<1x4xf32>
    %19 = vector.extract_strided_slice %17 {offsets = [1, 0], sizes = [1, 4], strides = [1, 1]} : vector<2x4xf32> to vector<1x4xf32>
    %20 = arith.addf %18, %19 : vector<1x4xf32>
    %21 = arith.negf %20 : vector<1x4xf32>
    %22 = math.exp %21 : vector<1x4xf32>
    %cst_15 = arith.constant 1.000000e+00 : f32
    %23 = vector.broadcast %cst_15 : f32 to vector<1x4xf32>
    %24 = arith.addf %23, %22 : vector<1x4xf32>
    %25 = arith.divf %23, %24 : vector<1x4xf32>
    %26 = vector.shape_cast %25 : vector<1x4xf32> to vector<1x4x1xf32>
    %27 = vector.shape_cast %26 : vector<1x4x1xf32> to vector<1x4x1xf32>
    %28 = vector.broadcast %27 : vector<1x4x1xf32> to vector<1x4x256xf32>
    %c0_16 = arith.constant 0 : index
    %c0_17 = arith.constant 0 : index
    %c0_18 = arith.constant 0 : index
    %29 = vector.load %arg6[%c0_16, %c0_17, %c0_18] : memref<1x4x256xf32, #tpu.memory_space<vmem>>, vector<1x4x256xf32>
    tpu.vector_store %arg6[%c0_16, %c0_17, %c0_18], %28 {strides = array<i32>} : memref<1x4x256xf32, #tpu.memory_space<vmem>>, vector<1x4x256xf32>,
    return
  }
  func.func @transform_0(%arg0: i32) -> (i32, i32, i32) {
    %c0_i32 = arith.constant 0 : i32
    %c0_i32_0 = arith.constant 0 : i32
    %c0_i32_1 = arith.constant 0 : i32
    return %arg0, %c0_i32, %c0_i32_0 : i32, i32, i32
  }
  func.func @transform_1(%arg0: i32) -> (i32, i32) {
    %c0_i32 = arith.constant 0 : i32
    %c0_i32_0 = arith.constant 0 : i32
    %c0_i32_1 = arith.constant 0 : i32
    return %c0_i32, %c0_i32_0 : i32, i32
  }
  func.func @transform_2(%arg0: i32) -> (i32, i32) {
    %c0_i32 = arith.constant 0 : i32
    %c0_i32_0 = arith.constant 0 : i32
    %c0_i32_1 = arith.constant 0 : i32
    return %c0_i32, %c0_i32_0 : i32, i32
  }
  func.func @transform_3(%arg0: i32) -> (i32, i32) {
    %c0_i32 = arith.constant 0 : i32
    %c0_i32_0 = arith.constant 0 : i32
    %c0_i32_1 = arith.constant 0 : i32
    return %c0_i32, %c0_i32_0 : i32, i32
  }
  func.func @transform_4(%arg0: i32) -> (i32, i32) {
    %c0_i32 = arith.constant 0 : i32
    %c0_i32_0 = arith.constant 0 : i32
    %c0_i32_1 = arith.constant 0 : i32
    return %c0_i32, %c0_i32_0 : i32, i32
  }
  func.func @transform_5(%arg0: i32) -> (i32, i32, i32) {
    %c0_i32 = arith.constant 0 : i32
    %c0_i32_0 = arith.constant 0 : i32
    %c0_i32_1 = arith.constant 0 : i32
    return %arg0, %c0_i32, %c0_i32_0 : i32, i32, i32
  }
}

</mosaic_0001>

<llo_original>
// kernel: tpu_custom_call.1
$region0: #{tpu_custom_call.1}
  #allocation0 [shape = 'u32[]', space=smem, size = 0x4, offset = 0x4, fixed_abs, tag = 'smem constant byte address 0x4 - core index']
  #allocation1 [shape = 'u32[144,128]{1,0:T(1,128)}', space=vmem, size = 0x12000, scoped, tag = 'internal scratch']
  %s0 = inlined_call_operand.hbm [shape: f32[2,4,256], index: 0, kind: input, shape index: {}]
  %s1 = inlined_call_operand.vmem [shape: f32[4,2], index: 1, kind: input, shape index: {}]
  %s2 = inlined_call_operand.vmem [shape: f32[1,2], index: 2, kind: input, shape index: {}]
  %s3 = inlined_call_operand.vmem [shape: f32[2,4], index: 3, kind: input, shape index: {}]
  %s4 = inlined_call_operand.vmem [shape: f32[1,4], index: 4, kind: input, shape index: {}]
  %s5 = inlined_call_operand.hbm [shape: f32[2,4,256], index: 5, kind: output, shape index: {}]
  %s6 = sld [smem:[#allocation0]]
  $region57: #{tpu_custom_call.1} parent=0
    _
  %s8 = ssub.s32 1, %s6
  %s9 = scalar_select 0, %s8, %s6
  $region1: #{tpu_custom_call.1} parent=0
    #allocation2 [shape = 'u8[8192]{0}', space=vmem, size = 0x2000, scoped, tag = 'input window, operand 0']
    #allocation3 [shape = 's32[2]{0}', space=sflag, size = 0x8, scoped, tag = 'scoped memory for tpu_custom_call.1']
    #allocation4 [shape = 's32[2]{0}', space=sflag, size = 0x8, scoped, tag = 'scoped memory for tpu_custom_call.1']
    #allocation5 [shape = 'u8[8192]{0}', space=vmem, size = 0x2000, scoped, tag = 'output window, operand 0']
    %10 = vsyncpa [#allocation3], 0
    %s11 = scalar_lea.sflag [#allocation3], 1
    %12 = vsyncpa %s11, 0
    %13 = vsyncpa [#allocation4], 0
    %s14 = scalar_lea.sflag [#allocation4], 1
    %15 = vsyncpa %s14, 0
    loop: start=0, step=1, limit=4
    $region2: #{tpu_custom_call.1} parent=1 // loop_pre_header
      _
    $region3: #{tpu_custom_call.1} parent=1 // loop_header
      %s17 = sphi 0, %s21
      %p18 = scmp.ge.s32.totalorder %s17, 4
      %s27 = sphi 0, %s29
      %s30 = sphi 0, %s27
      %s31 = sphi 0, %s30
      %s47 = sphi 0, %s31
      %s51 = sphi 0, %s51
      %s53 = sphi 0, %s51
      %s54 = sphi 0, %s53
      %s68 = sphi 0, %s54
      %s72 = sphi 0, %s72
      %s74 = sphi 0, %s72
      %s75 = sphi 0, %s74
      %s89 = sphi 0, %s75
      %s93 = sphi 0, %s93
      %s95 = sphi 0, %s93
      %s96 = sphi 0, %s95
      %s110 = sphi 0, %s96
      %s114 = sphi 0, %s114
      %s116 = sphi 0, %s114
      %s117 = sphi 0, %s116
      %s131 = sphi 0, %s117
      %s137 = sphi 0, %s139
      %s140 = sphi 0, %s137
      %s141 = sphi 0, %s140
      %s157 = sphi 0, %s141
    $region4: #{tpu_custom_call.1} parent=1 // loop_header_branch
      %20 = sbr.rel (%p18) target = $region8
    $region5: #{tpu_custom_call.1} parent=1 // loop_body
      %s22 = ssub.s32 %s17, 1
      %s23 = ssub.s32 %s17, 2
      %s24 = sadd.s32 %s17, 1
      %s25 = ssub.s32 %s17, %s24
      %p26 = scmp.eq.s32.totalorder %s25, 0
      %s28 = sadd.s32 %s27, 1
      %s29 = scalar_select %p26, %s27, %s28
      %p32 = pneg %p26
      %p33 = scmp.eq.s32.totalorder %s17, 1
      %p34 = por %p32, %p33
      %p35 = scmp.ne.s32.totalorder %s27, %s30
      %p36 = scmp.eq.s32.totalorder %s17, 0
      %p37 = por %p35, %p36
      %p38 = scmp.ne.s32.totalorder %s27, %s30
      %p39 = scmp.eq.s32.totalorder %s22, 1
      %p40 = por %p38, %p39
      %p41 = scmp.ne.s32.totalorder %s30, %s31
      %p42 = scmp.eq.s32.totalorder %s22, 0
      %p43 = por %p41, %p42
      %p44 = scmp.ne.s32.totalorder %s30, %s31
      %p45 = scmp.eq.s32.totalorder %s23, 1
      %p46 = por %p44, %p45
      %p48 = scmp.ne.s32.totalorder %s31, %s47
      %p49 = scmp.eq.s32.totalorder %s23, 0
      %p50 = por %p48, %p49
      %s52 = sadd.s32 %s51, 1
      %p55 = scmp.eq.s32.totalorder %s17, 1
      %p56 = scmp.ne.s32.totalorder %s51, %s53
      %p57 = scmp.eq.s32.totalorder %s17, 0
      %p58 = por %p56, %p57
      %p59 = scmp.ne.s32.totalorder %s51, %s53
      %p60 = scmp.eq.s32.totalorder %s22, 1
      %p61 = por %p59, %p60
      %p62 = scmp.ne.s32.totalorder %s53, %s54
      %p63 = scmp.eq.s32.totalorder %s22, 0
      %p64 = por %p62, %p63
      %p65 = scmp.ne.s32.totalorder %s53, %s54
      %p66 = scmp.eq.s32.totalorder %s23, 1
      %p67 = por %p65, %p66
      %p69 = scmp.ne.s32.totalorder %s54, %s68
      %p70 = scmp.eq.s32.totalorder %s23, 0
      %p71 = por %p69, %p70
      %s73 = sadd.s32 %s72, 1
      %p76 = scmp.eq.s32.totalorder %s17, 1
      %p77 = scmp.ne.s32.totalorder %s72, %s74
      %p78 = scmp.eq.s32.totalorder %s17, 0
      %p79 = por %p77, %p78
      %p80 = scmp.ne.s32.totalorder %s72, %s74
      %p81 = scmp.eq.s32.totalorder %s22, 1
      %p82 = por %p80, %p81
      %p83 = scmp.ne.s32.totalorder %s74, %s75
      %p84 = scmp.eq.s32.totalorder %s22, 0
      %p85 = por %p83, %p84
      %p86 = scmp.ne.s32.totalorder %s74, %s75
      %p87 = scmp.eq.s32.totalorder %s23, 1
      %p88 = por %p86, %p87
      %p90 = scmp.ne.s32.totalorder %s75, %s89
      %p91 = scmp.eq.s32.totalorder %s23, 0
      %p92 = por %p90, %p91
      %s94 = sadd.s32 %s93, 1
      %p97 = scmp.eq.s32.totalorder %s17, 1
      %p98 = scmp.ne.s32.totalorder %s93, %s95
      %p99 = scmp.eq.s32.totalorder %s17, 0
      %p100 = por %p98, %p99
      %p101 = scmp.ne.s32.totalorder %s93, %s95
      %p102 = scmp.eq.s32.totalorder %s22, 1
      %p103 = por %p101, %p102
      %p104 = scmp.ne.s32.totalorder %s95, %s96
      %p105 = scmp.eq.s32.totalorder %s22, 0
      %p106 = por %p104, %p105
      %p107 = scmp.ne.s32.totalorder %s95, %s96
      %p108 = scmp.eq.s32.totalorder %s23, 1
      %p109 = por %p107, %p108
      %p111 = scmp.ne.s32.totalorder %s96, %s110
      %p112 = scmp.eq.s32.totalorder %s23, 0
      %p113 = por %p111, %p112
      %s115 = sadd.s32 %s114, 1
      %p118 = scmp.eq.s32.totalorder %s17, 1
      %p119 = scmp.ne.s32.totalorder %s114, %s116
      %p120 = scmp.eq.s32.totalorder %s17, 0
      %p121 = por %p119, %p120
      %p122 = scmp.ne.s32.totalorder %s114, %s116
      %p123 = scmp.eq.s32.totalorder %s22, 1
      %p124 = por %p122, %p123
      %p125 = scmp.ne.s32.totalorder %s116, %s117
      %p126 = scmp.eq.s32.totalorder %s22, 0
      %p127 = por %p125, %p126
      %p128 = scmp.ne.s32.totalorder %s116, %s117
      %p129 = scmp.eq.s32.totalorder %s23, 1
      %p130 = por %p128, %p129
      %p132 = scmp.ne.s32.totalorder %s117, %s131
      %p133 = scmp.eq.s32.totalorder %s23, 0
      %p134 = por %p132, %p133
      %s135 = ssub.s32 %s17, %s24
      %p136 = scmp.eq.s32.totalorder %s135, 0
      %s138 = sadd.s32 %s137, 1
      %s139 = scalar_select %p136, %s137, %s138
      %p142 = pneg %p136
      %p143 = scmp.eq.s32.totalorder %s17, 1
      %p144 = por %p142, %p143
      %p145 = scmp.ne.s32.totalorder %s137, %s140
      %p146 = scmp.eq.s32.totalorder %s17, 0
      %p147 = por %p145, %p146
      %p148 = scmp.ne.s32.totalorder %s137, %s140
      %p149 = scmp.eq.s32.totalorder %s22, 1
      %p150 = por %p148, %p149
      %p151 = scmp.ne.s32.totalorder %s140, %s141
      %p152 = scmp.eq.s32.totalorder %s22, 0
      %p153 = por %p151, %p152
      %p154 = scmp.ne.s32.totalorder %s140, %s141
      %p155 = scmp.eq.s32.totalorder %s23, 1
      %p156 = por %p154, %p155
      %p158 = scmp.ne.s32.totalorder %s141, %s157
      %p159 = scmp.eq.s32.totalorder %s23, 0
      %p160 = por %p158, %p159
      %p161 = scmp.le.s32.totalorder 1, %s17
      %p162 = scmp.lt.s32.totalorder %s17, 3
      %p163 = pnand %p161, %p162
      %p164 = pneg %p163
      // Predicated region
      $region9: #{tpu_custom_call.1} parent=5 // pred_check
        _
      $region10: #{tpu_custom_call.1} parent=5 // pred_check_branch
        %166 = sbr.rel (%p163) target = $region12
      $region11: #{tpu_custom_call.1} parent=5 // pred_region
        %s167 = ssub.s32 %s17, 1
        // Predicated region
        $region13: #{tpu_custom_call.1} parent=11 // pred_check
          %p168 = pneg %p64
        $region14: #{tpu_custom_call.1} parent=11 // pred_check_branch
          %170 = sbr.rel (%p168) target = $region16
        $region15: #{tpu_custom_call.1} parent=11 // pred_region
          _
        $region16: #{tpu_custom_call.1} parent=11 // pred_fallthru
          _
        // Predicated region
        $region17: #{tpu_custom_call.1} parent=11 // pred_check
          %p171 = pneg %p85
        $region18: #{tpu_custom_call.1} parent=11 // pred_check_branch
          %173 = sbr.rel (%p171) target = $region20
        $region19: #{tpu_custom_call.1} parent=11 // pred_region
          _
        $region20: #{tpu_custom_call.1} parent=11 // pred_fallthru
          _
        // Predicated region
        $region21: #{tpu_custom_call.1} parent=11 // pred_check
          %p174 = pneg %p106
        $region22: #{tpu_custom_call.1} parent=11 // pred_check_branch
          %176 = sbr.rel (%p174) target = $region24
        $region23: #{tpu_custom_call.1} parent=11 // pred_region
          _
        $region24: #{tpu_custom_call.1} parent=11 // pred_fallthru
          _
        // Predicated region
        $region25: #{tpu_custom_call.1} parent=11 // pred_check
          %p177 = pneg %p127
        $region26: #{tpu_custom_call.1} parent=11 // pred_check_branch
          %179 = sbr.rel (%p177) target = $region28
        $region27: #{tpu_custom_call.1} parent=11 // pred_region
          _
        $region28: #{tpu_custom_call.1} parent=11 // pred_fallthru
          _
      $region12: #{tpu_custom_call.1} parent=5 // pred_fallthru
        _
      %p180 = scmp.lt.s32.totalorder %s17, 2
      // Predicated region
      $region29: #{tpu_custom_call.1} parent=5 // pred_check
        %p181 = pneg %p180
      $region30: #{tpu_custom_call.1} parent=5 // pred_check_branch
        %183 = sbr.rel (%p181) target = $region32
      $region31: #{tpu_custom_call.1} parent=5 // pred_region
        // Predicated region
        $region33: #{tpu_custom_call.1} parent=31 // pred_check
          %p184 = pneg %p37
        $region34: #{tpu_custom_call.1} parent=31 // pred_check_branch
          %186 = sbr.rel (%p184) target = $region36
        $region35: #{tpu_custom_call.1} parent=31 // pred_region
          %s187 = sand.u32 %s27, 1
          %s188 = scalar_lea.sflag [#allocation3], %s187
          %s189 = sand.u32 %s27, 1
          %s190 = smul.addr %s189, 8
          %s191 = scalar_lea.vmem [#allocation2], %s190
          %s193 = ssub.s32 128, 128
          %194 = vsyncadd %s188, %s193
          %s195 = smul.addr %s17, 2
          %s196 = smul.addr %s195, 64
          %s197 = scalar_lea.hbm %s0, %s196
          %s199 = sshll.u32 %s191, 4
          %s200 = int_to_ptr.vmem [resolvable:$true] %s199
          %202 = dma.hbm_to_vmem [thread:$0]  %s197, 128, %s200, %s188
        $region36: #{tpu_custom_call.1} parent=31 // pred_fallthru
          _
      $region32: #{tpu_custom_call.1} parent=5 // pred_fallthru
        _
      %p203 = scmp.le.s32.totalorder 1, %s17
      %p204 = scmp.lt.s32.totalorder %s17, 3
      %p205 = pnand %p203, %p204
      %p206 = pneg %p205
      // Predicated region
      $region37: #{tpu_custom_call.1} parent=5 // pred_check
        _
      $region38: #{tpu_custom_call.1} parent=5 // pred_check_branch
        %208 = sbr.rel (%p205) target = $region40
      $region39: #{tpu_custom_call.1} parent=5 // pred_region
        %s209 = ssub.s32 %s17, 1
        %s210 = sand.u32 %s30, 1
        %s211 = scalar_lea.sflag [#allocation3], %s210
        %s212 = sand.u32 %s30, 1
        %s213 = smul.addr %s212, 8
        %s214 = scalar_lea.vmem [#allocation2], %s213
        // Predicated region
        $region41: #{tpu_custom_call.1} parent=39 // pred_check
          %p215 = pneg %p43
        $region42: #{tpu_custom_call.1} parent=39 // pred_check_branch
          %217 = sbr.rel (%p215) target = $region44
        $region43: #{tpu_custom_call.1} parent=39 // pred_region
          %218 = dma.done %s211, 128
        $region44: #{tpu_custom_call.1} parent=39 // pred_fallthru
          _
        %s219 = sand.u32 %s30, 1
        %s220 = scalar_lea.sflag [#allocation3], %s219
        %s221 = sand.u32 %s30, 1
        %s222 = smul.addr %s221, 8
        %s223 = scalar_lea.vmem [#allocation2], %s222
        %p224 = pneg %p43
        %p225 = pneg %p40
        %p226 = pneg %p64
        %p227 = pneg %p61
        %p228 = pneg %p85
        %p229 = pneg %p82
        %p230 = pneg %p106
        %p231 = pneg %p103
        %p232 = pneg %p127
        %p233 = pneg %p124
        %p234 = pneg %p153
        %p235 = pneg %p150
        %s236 = sand.u32 %s140, 1
        %s237 = scalar_lea.sflag [#allocation4], %s236
        %s238 = sand.u32 %s140, 1
        %s239 = smul.addr %s238, 8
        %s240 = scalar_lea.vmem [#allocation5], %s239
        %v241 = vld [vmem:[%s214] sm:$0xff]
        %v243 = vcombine.high %v241, %v241
        %vm245 = vcmask 1043456
        %v246 = vsel %vm245, %v241, 0.0
        %v247 = vsel %vm245, %v243, 0.0
        %v248 = vadd.f32 %v246, %v247
        %249 = vadd.xlane.f32.xlu0 %v248
        %v250 = vpop.xlane.xlu0 %249
        %v251 = vmul.f32 %v250, 0.00390625
        %v252 = vsel %vm245, %v241, -inf
        %v253 = vsel %vm245, %v243, -inf
        %v254 = vmax.f32 %v252, %v253
        %255 = vmax.xlane.f32.xlu0 %v254
        %v256 = vpop.xlane.xlu0 %255
        %v258 = vlaneseq
        %v259 = vand.u32 %v258, 127
        %v260 = vlaneseq
        %v261 = vshrl.u32 %v260, 7
        %v262 = vsub.s32 %v259, %v261
        %v263 = vrot.slane %v251, %v262
        %v266 = vlaneseq
        %v267 = vshrl.u32 %v266, 7
        %v268 = vsub.s32 %v259, %v267
        %v269 = vrot.slane %v256, %v268
        %vm271 = vcmask 1040384
        %v272 = vsel %vm271, %v263, %v269
        %v273 = vld [vmem:[%s1] sm:$0xf]
        %v274 = vld [vmem:[%s2] sm:$0x1]
        %v276 = vlaneseq
        %v277 = vshrl.u32 %v276, 7
        %v278 = vsub.s32 0, %v277
        %v279 = vrot.slane %v274, %v278
        %vm281 = vcmask 31744
        %v283 = vsel %vm281, %v272, 0
        %v286 = vsel %vm245, %v273, 0
        %288 = vmatprep.subr.mxu0 0.0
        %289 = vmatpush1.msra.mxu0 %v286
        %290 = vmatprep.subr.mxu0 0.0
        %291 = vmatpush1.msra.mxu0 0.0
        %292 = vmatprep.subr.mxu0 0.0
        %293 = vmatpush1.msra.mxu0 0.0
        %294 = vmatprep.subr.mxu0 0.0
        %295 = vmatpush1.msra.mxu0 0.0
        %296 = vmatprep.subr.mxu0 0.0
        %297 = vmatpush1.msra.mxu0 0.0
        %298 = vmatprep.subr.mxu0 0.0
        %299 = vmatpush1.msra.mxu0 0.0
        %300 = vmatprep.subr.mxu0 0.0
        %301 = vmatpush1.msra.mxu0 0.0
        %302 = vmatprep.subr.mxu0 0.0
        %303 = vmatpush1.msra.mxu0 0.0
        %304 = vmatprep.subr.mxu0 0.0
        %305 = vmatpush1.msra.mxu0 0.0
        %306 = vmatprep.subr.mxu0 0.0
        %307 = vmatpush1.msra.mxu0 0.0
        %308 = vmatprep.subr.mxu0 0.0
        %309 = vmatpush1.msra.mxu0 0.0
        %310 = vmatprep.subr.mxu0 0.0
        %311 = vmatpush1.msra.mxu0 0.0
        %312 = vmatprep.subr.mxu0 0.0
        %313 = vmatpush1.msra.mxu0 0.0
        %314 = vmatprep.subr.mxu0 0.0
        %315 = vmatpush1.msra.mxu0 0.0
        %316 = vmatprep.subr.mxu0 0.0
        %317 = vmatpush1.msra.mxu0 0.0
        %318 = vmatprep.subr.mxu0 0.0
        %319 = vmatpush1.msra.mxu0 0.0
        %320 = vmatprep.subr.mxu0 0.0
        %321 = vmatpush1.msra.mxu0 0.0
        %322 = vmatprep.subr.mxu0 0.0
        %323 = vmatpush1.msra.mxu0 0.0
        %324 = vmatprep.subr.mxu0 0.0
        %325 = vmatpush1.msra.mxu0 0.0
        %326 = vmatprep.subr.mxu0 0.0
        %327 = vmatpush1.msra.mxu0 0.0
        %328 = vmatprep.subr.mxu0 0.0
        %329 = vmatpush1.msra.mxu0 0.0
        %330 = vmatprep.subr.mxu0 0.0
        %331 = vmatpush1.msra.mxu0 0.0
        %332 = vmatprep.subr.mxu0 0.0
        %333 = vmatpush1.msra.mxu0 0.0
        %334 = vmatprep.subr.mxu0 0.0
        %335 = vmatpush1.msra.mxu0 0.0
        %336 = vmatprep.subr.mxu0 0.0
        %337 = vmatpush1.msra.mxu0 0.0
        %338 = vmatprep.subr.mxu0 0.0
        %339 = vmatpush1.msra.mxu0 0.0
        %340 = vmatprep.subr.mxu0 0.0
        %341 = vmatpush1.msra.mxu0 0.0
        %342 = vmatprep.subr.mxu0 0.0
        %343 = vmatpush1.msra.mxu0 0.0
        %344 = vmatprep.subr.mxu0 0.0
        %345 = vmatpush1.msra.mxu0 0.0
        %346 = vmatprep.subr.mxu0 0.0
        %347 = vmatpush1.msra.mxu0 0.0
        %348 = vmatprep.subr.mxu0 0.0
        %349 = vmatpush1.msra.mxu0 0.0
        %350 = vmatprep.subr.mxu0 0.0
        %351 = vmatpush1.msra.mxu0 0.0
        %352 = vmatprep.mubr.f32.mxu0 0.0
        %353 = vmatmul.mubr.f32.gmra.mrb[0].mxu0 %v283
        %v354 = vpop.f32.mrb[0].mxu0
        %v355 = vadd.f32 %v279, %v354
        %v356 = vpop.f32.mrb[0].mxu0
        %357 = vdwg.mxu0
        %v358 = vmax.f32 %v355, 0.0
        %v359 = vld [vmem:[%s3] sm:$0x3]
        %v360 = vld [vmem:[%s4] sm:$0x1]
        %v362 = vlaneseq
        %v363 = vshrl.u32 %v362, 7
        %v364 = vsub.s32 0, %v363
        %v365 = vrot.slane %v360, %v364
        %vm367 = vcmask 15360
        %v369 = vsel %vm367, %v358, 0
        %vm371 = vcmask 1041408
        %v373 = vsel %vm371, %v359, 0
        %375 = vmatprep.subr.mxu0 0.0
        %376 = vmatpush1.msra.mxu0 %v373
        %377 = vmatprep.subr.mxu0 0.0
        %378 = vmatpush1.msra.mxu0 0.0
        %379 = vmatprep.subr.mxu0 0.0
        %380 = vmatpush1.msra.mxu0 0.0
        %381 = vmatprep.subr.mxu0 0.0
        %382 = vmatpush1.msra.mxu0 0.0
        %383 = vmatprep.subr.mxu0 0.0
        %384 = vmatpush1.msra.mxu0 0.0
        %385 = vmatprep.subr.mxu0 0.0
        %386 = vmatpush1.msra.mxu0 0.0
        %387 = vmatprep.subr.mxu0 0.0
        %388 = vmatpush1.msra.mxu0 0.0
        %389 = vmatprep.subr.mxu0 0.0
        %390 = vmatpush1.msra.mxu0 0.0
        %391 = vmatprep.subr.mxu0 0.0
        %392 = vmatpush1.msra.mxu0 0.0
        %393 = vmatprep.subr.mxu0 0.0
        %394 = vmatpush1.msra.mxu0 0.0
        %395 = vmatprep.subr.mxu0 0.0
        %396 = vmatpush1.msra.mxu0 0.0
        %397 = vmatprep.subr.mxu0 0.0
        %398 = vmatpush1.msra.mxu0 0.0
        %399 = vmatprep.subr.mxu0 0.0
        %400 = vmatpush1.msra.mxu0 0.0
        %401 = vmatprep.subr.mxu0 0.0
        %402 = vmatpush1.msra.mxu0 0.0
        %403 = vmatprep.subr.mxu0 0.0
        %404 = vmatpush1.msra.mxu0 0.0
        %405 = vmatprep.subr.mxu0 0.0
        %406 = vmatpush1.msra.mxu0 0.0
        %407 = vmatprep.subr.mxu0 0.0
        %408 = vmatpush1.msra.mxu0 0.0
        %409 = vmatprep.subr.mxu0 0.0
        %410 = vmatpush1.msra.mxu0 0.0
        %411 = vmatprep.subr.mxu0 0.0
        %412 = vmatpush1.msra.mxu0 0.0
        %413 = vmatprep.subr.mxu0 0.0
        %414 = vmatpush1.msra.mxu0 0.0
        %415 = vmatprep.subr.mxu0 0.0
        %416 = vmatpush1.msra.mxu0 0.0
        %417 = vmatprep.subr.mxu0 0.0
        %418 = vmatpush1.msra.mxu0 0.0
        %419 = vmatprep.subr.mxu0 0.0
        %420 = vmatpush1.msra.mxu0 0.0
        %421 = vmatprep.subr.mxu0 0.0
        %422 = vmatpush1.msra.mxu0 0.0
        %423 = vmatprep.subr.mxu0 0.0
        %424 = vmatpush1.msra.mxu0 0.0
        %425 = vmatprep.subr.mxu0 0.0
        %426 = vmatpush1.msra.mxu0 0.0
        %427 = vmatprep.subr.mxu0 0.0
        %428 = vmatpush1.msra.mxu0 0.0
        %429 = vmatprep.subr.mxu0 0.0
        %430 = vmatpush1.msra.mxu0 0.0
        %431 = vmatprep.subr.mxu0 0.0
        %432 = vmatpush1.msra.mxu0 0.0
        %433 = vmatprep.subr.mxu0 0.0
        %434 = vmatpush1.msra.mxu0 0.0
        %435 = vmatprep.subr.mxu0 0.0
        %436 = vmatpush1.msra.mxu0 0.0
        %437 = vmatprep.subr.mxu0 0.0
        %438 = vmatpush1.msra.mxu0 0.0
        %439 = vmatprep.mubr.f32.mxu0 0.0
        %440 = vmatmul.mubr.f32.gmra.mrb[0].mxu0 %v369
        %v441 = vpop.f32.mrb[0].mxu0
        %v442 = vadd.f32 %v365, %v441
        %v443 = vpop.f32.mrb[0].mxu0
        %444 = vdwg.mxu0
        %v446 = vrot.slane %v442, 1
        %v448 = vadd.f32 %v442, %v446
        %v449 = vxor.u32 %v448, 2147483648
        %v450 = vmul.f32 %v449, 1.442695
        %v451 = vpow.pop %v450
        %v452 = vadd.f32 %v451, 1.0
        %v453 = vrcp.pop %v452
        %v454 = vmul.f32 1.0, %v453
        %v455 = vlaneseq
        %v456 = vshrl.u32 %v455, 7
        %v457 = vsub.s32 0, %v456
        %v458 = vrot.slane %v454, %v457
        %460 = vbcast.lane.b32.xlu0 %v458, 256
        %v461 = vpop.permute.xlu0 %460
        %v464 = vunpack.c.l.s4 839922192
        %v465 = vunpack.c.0.s8 %v464
        %v466 = vlaneseq
        %v467 = vshrl.u32 %v466, 7
        %v468 = vsub.s32 %v465, %v467
        %v469 = vrot.slane %v461, %v468
        %471 = vst [vmem:[%s240] sm:$0xff] %v469
        %s472 = sand.u32 %s140, 1
        %s473 = scalar_lea.sflag [#allocation4], %s472
        %s474 = sand.u32 %s140, 1
        %s475 = smul.addr %s474, 8
        %s476 = scalar_lea.vmem [#allocation5], %s475
        // Predicated region
        $region45: #{tpu_custom_call.1} parent=39 // pred_check
          %p477 = pneg %p150
        $region46: #{tpu_custom_call.1} parent=39 // pred_check_branch
          %479 = sbr.rel (%p477) target = $region48
        $region47: #{tpu_custom_call.1} parent=39 // pred_region
          %s481 = ssub.s32 128, 128
          %482 = vsyncadd %s473, %s481
          %s483 = smul.addr %s22, 2
          %s484 = smul.addr %s483, 64
          %s485 = scalar_lea.hbm %s5, %s484
          %s487 = sshll.u32 %s476, 4
          %s488 = int_to_ptr.vmem [resolvable:$true] %s487
          %490 = dma.vmem_to_hbm [thread:$0]  %s488, 128, %s485, %s473
        $region48: #{tpu_custom_call.1} parent=39 // pred_fallthru
          _
      $region40: #{tpu_custom_call.1} parent=5 // pred_fallthru
        _
      %p491 = scmp.le.s32.totalorder 2, %s17
      // Predicated region
      $region49: #{tpu_custom_call.1} parent=5 // pred_check
        %p492 = pneg %p491
      $region50: #{tpu_custom_call.1} parent=5 // pred_check_branch
        %494 = sbr.rel (%p492) target = $region52
      $region51: #{tpu_custom_call.1} parent=5 // pred_region
        %s495 = ssub.s32 %s17, 2
        // Predicated region
        $region53: #{tpu_custom_call.1} parent=51 // pred_check
          %p496 = pneg %p156
        $region54: #{tpu_custom_call.1} parent=51 // pred_check_branch
          %498 = sbr.rel (%p496) target = $region56
        $region55: #{tpu_custom_call.1} parent=51 // pred_region
          %s499 = sand.u32 %s141, 1
          %s500 = scalar_lea.sflag [#allocation4], %s499
          %s501 = sand.u32 %s141, 1
          %s502 = smul.addr %s501, 8
          %s503 = scalar_lea.vmem [#allocation5], %s502
          %504 = dma.done %s500, 128
        $region56: #{tpu_custom_call.1} parent=51 // pred_fallthru
          _
      $region52: #{tpu_custom_call.1} parent=5 // pred_fallthru
        _
    $region6: #{tpu_custom_call.1} parent=1 // loop_footer
      %s21 = sadd.s32 1, %s17
    $region7: #{tpu_custom_call.1} parent=1 // loop_footer_branch
      %16 = sbr.rel target = $region3
    $region8: #{tpu_custom_call.1} parent=1 // loop_exit
      _
    %505 = vsyncpa [#allocation3], 1
    %s506 = scalar_lea.sflag [#allocation3], 1
    %507 = vsyncpa %s506, 1
    %508 = vsyncpa [#allocation4], 1
    %s509 = scalar_lea.sflag [#allocation4], 1
    %510 = vsyncpa %s509, 1

</llo_original>
